<compile_context>
chip_gen: v7x
topology: tpu7x:2x2x1
jax: 0.10.0
libtpu: 0.0.40
codegen_flags: <defaults>
</compile_context>

<pallas_src>
import jax
import jax.numpy as jnp
from jax.experimental import pallas as pl
from jax.experimental.pallas import tpu as pltpu

# Model hyper-parameters (small, consistent with Net(embedding_dim, num_layers,
# hidden_dim); reduced from 300/256 to TPU-friendly small sizes).
EMBED_DIM   = 64     # embedding_dim
HIDDEN_DIM  = 128    # hidden_dim
NUM_LAYERS  = 3      # num_layers
NUM_CLASSES = 8      # entity label set size (class 0 == "no entity")
SEQ_LEN     = 8      # tokens per text
BATCH       = 1      # forward() processes a single text: text2bert([text])

MAX_ROW_TILE = 128   # max token-rows per grid step (fills the MXU row dim)
HEAD_LANES   = 128   # fused+padded head output lanes (>= 2*NUM_CLASSES)


def _net_kernel(x_ref, w0_ref, b0_ref, wr_ref, br_ref, wh_ref, bh_ref, out_ref):
    """One row tile of tokens per grid step.

    x_ref   : (ROW_TILE, E)   f32   token features (rows = flattened batch*seq)
    w0_ref  : (E, H)          bf16  first Features layer
    b0_ref  : (1, H)          f32
    wr_ref  : (L-1, H, H)     bf16  remaining Features layers (stacked)
    br_ref  : (L-1, 1, H)     f32
    wh_ref  : (H, 128)        bf16  fused Begin|End head, zero-padded lanes
    bh_ref  : (1, 128)        f32
    out_ref : (ROW_TILE, 128) f32   [:, :C]=Begin scores, [:, C:2C]=End scores
    """
    # Features: stack of Linear + ReLU layers. bf16 MXU inputs, f32 accumulate,
    # f32 epilogue (bias + ReLU) — cheap on all generations incl. v5e.
    h = jnp.maximum(
        jnp.dot(x_ref[...].astype(jnp.bfloat16), w0_ref[...],
                preferred_element_type=jnp.float32) + b0_ref[...],
        0.0)
    for l in range(NUM_LAYERS - 1):                                   # static unroll
        h = jnp.maximum(
            jnp.dot(h.astype(jnp.bfloat16), wr_ref[l],
                    preferred_element_type=jnp.float32) + br_ref[l],
            0.0)

    # Locate_Entity: single fused, lane-dense head matmul (Begin|End packed).
    out_ref[...] = jnp.dot(h.astype(jnp.bfloat16), wh_ref[...],
                           preferred_element_type=jnp.float32) + bh_ref[...]


@jax.jit
def net_scores(text_features, params):
    """Runs Features + Locate_Entity inside a single Pallas kernel.

    Returns (entity_B_scores, entity_E_scores), each [B, T, NUM_CLASSES] f32.
    """
    B, T, E = text_features.shape
    H, C, L = HIDDEN_DIM, NUM_CLASSES, NUM_LAYERS
    w0, b0, wr, br, wb, bb, we, be = params

    # Fuse the two heads into one lane-dense (H, 128) weight / (1, 128) bias.
    wh = jnp.zeros((H, HEAD_LANES), jnp.bfloat16)
    wh = wh.at[:, :C].set(wb).at[:, C:2 * C].set(we)
    bh = jnp.zeros((1, HEAD_LANES), jnp.float32)
    bh = bh.at[:, :C].set(bb).at[:, C:2 * C].set(be)

    # Fold batch*seq into rows; adaptive row tile (multiple of 8, max 128).
    rows = B * T
    row_tile = min(MAX_ROW_TILE, ((rows + 7) // 8) * 8)
    n_tiles = pl.cdiv(rows, row_tile)
    rows_pad = n_tiles * row_tile
    x2 = text_features.reshape(rows, E)
    if rows_pad != rows:
        x2 = jnp.pad(x2, ((0, rows_pad - rows), (0, 0)))

    full = lambda shape: pl.BlockSpec(shape, lambda i: (0,) * len(shape))

    grid_spec = pltpu.PrefetchScalarGridSpec(
        num_scalar_prefetch=0,
        grid=(n_tiles,),
        in_specs=[
            pl.BlockSpec((row_tile, E), lambda i: (i, 0)),   # x: one row tile
            full((E, H)), full((1, H)),
            full((L - 1, H, H)), full((L - 1, 1, H)),
            full((H, HEAD_LANES)), full((1, HEAD_LANES)),
        ],
        out_specs=pl.BlockSpec((row_tile, HEAD_LANES), lambda i: (i, 0)),
    )

    flops = 2 * rows_pad * (E * H + (L - 1) * H * H + H * HEAD_LANES)
    bytes_accessed = (
        x2.size * 4
        + w0.size * 2 + b0.size * 4 + wr.size * 2 + br.size * 4
        + wh.size * 2 + bh.size * 4
        + rows_pad * HEAD_LANES * 4)

    out = pl.pallas_call(
        _net_kernel,
        out_shape=jax.ShapeDtypeStruct((rows_pad, HEAD_LANES), jnp.float32),
        grid_spec=grid_spec,
        compiler_params=pltpu.CompilerParams(dimension_semantics=("parallel",)),
        cost_estimate=pl.CostEstimate(
            flops=flops, transcendentals=0, bytes_accessed=bytes_accessed),
    )(x2, w0, b0, wr, br, wh, bh)

    scores = out[:rows].reshape(B, T, HEAD_LANES)
    return scores[..., :C], scores[..., C:2 * C]


def init_params(key):
    """Deterministic parameter init matching the module's layer shapes.

    Matmul weights are stored in bf16 (MXU inputs); biases stay f32.
    """
    E, H, C, L = EMBED_DIM, HIDDEN_DIM, NUM_CLASSES, NUM_LAYERS
    ks = jax.random.split(key, 8)
    scale = lambda fan_in: 1.0 / jnp.sqrt(jnp.float32(fan_in))
    w0 = (jax.random.normal(ks[0], (E, H), jnp.float32) * scale(E)).astype(jnp.bfloat16)
    b0 = jax.random.normal(ks[1], (1, H), jnp.float32) * 0.01
    wr = (jax.random.normal(ks[2], (L - 1, H, H), jnp.float32) * scale(H)).astype(jnp.bfloat16)
    br = jax.random.normal(ks[3], (L - 1, 1, H), jnp.float32) * 0.01
    wb = (jax.random.normal(ks[4], (H, C), jnp.float32) * scale(H)).astype(jnp.bfloat16)
    bb = jax.random.normal(ks[5], (1, C), jnp.float32) * 0.01
    we = (jax.random.normal(ks[6], (H, C), jnp.float32) * scale(H)).astype(jnp.bfloat16)
    be = jax.random.normal(ks[7], (1, C), jnp.float32) * 0.01
    return (w0, b0, wr, br, wb, bb, we, be)


def net_forward(text_features, params):
    """Full Net.forward(): kernel scores + python entity-span decode."""
    b_scores, e_scores = net_scores(text_features, params)
    # PyTorch: entity_B_scores[0].argmax(-1).tolist()
    entity_B = jnp.argmax(b_scores[0], axis=-1)
    entity_E = jnp.argmax(e_scores[0], axis=-1)
    entity_B = [int(v) for v in jax.device_get(entity_B)]
    entity_E = [int(v) for v in jax.device_get(entity_E)]

    entity_predict = []
    for entity_B_idx, entity_B_score in enumerate(entity_B):
        if entity_B_score > 0:
            for entity_E_idx, entity_E_score in enumerate(entity_E[entity_B_idx:]):
                if entity_E_score == entity_B_score:
                    entity_predict.append(
                        (entity_B_idx, entity_B_idx + entity_E_idx, entity_B_score))
                    break
    return entity_predict, (b_scores, e_scores)


if __name__ == "__main__":
    key = jax.random.PRNGKey(0)
    k_param, k_x = jax.random.split(key)

    params = init_params(k_param)
    # Stand-in for text2bert([text]) output: [B, T, EMBED_DIM] token features.
    text_features = jax.random.normal(k_x, (BATCH, SEQ_LEN, EMBED_DIM), jnp.float32)

    entity_predict, (b_scores, e_scores) = net_forward(text_features, params)
    jax.block_until_ready(b_scores)
    jax.block_until_ready(e_scores)

    # Sanity check against a pure-JAX reference doing the same bf16-input /
    # f32-accumulate math.
    def ref(x, p):
        w0, b0, wr, br, wb, bb, we, be = p
        h = jnp.maximum(
            jnp.dot(x.astype(jnp.bfloat16), w0,
                    preferred_element_type=jnp.float32) + b0, 0.0)
        for l in range(NUM_LAYERS - 1):
            h = jnp.maximum(
                jnp.dot(h.astype(jnp.bfloat16), wr[l],
                        preferred_element_type=jnp.float32) + br[l], 0.0)
        hb = h.astype(jnp.bfloat16)
        return (jnp.dot(hb, wb, preferred_element_type=jnp.float32) + bb,
                jnp.dot(hb, we, preferred_element_type=jnp.float32) + be)

    rb, re = ref(text_features, params)
    assert jnp.allclose(b_scores, rb, atol=1e-2, rtol=1e-2), \
        float(jnp.max(jnp.abs(b_scores - rb)))
    assert jnp.allclose(e_scores, re, atol=1e-2, rtol=1e-2), \
        float(jnp.max(jnp.abs(e_scores - re)))

    print("KERNEL_OK")
</pallas_src>

<mosaic_0001>
module attributes {stable_mosaic.version = 11 : i64} {
  func.func @_net_kernel(%arg0: i32, %arg1: memref<8x64xf32, #tpu.memory_space<vmem>>, %arg2: memref<64x128xbf16, #tpu.memory_space<vmem>>, %arg3: memref<1x128xf32, #tpu.memory_space<vmem>>, %arg4: memref<2x128x128xbf16, #tpu.memory_space<vmem>>, %arg5: memref<2x1x128xf32, #tpu.memory_space<vmem>>, %arg6: memref<128x128xbf16, #tpu.memory_space<vmem>>, %arg7: memref<1x128xf32, #tpu.memory_space<vmem>>, %arg8: memref<8x128xf32, #tpu.memory_space<vmem>>) attributes {dimension_semantics = [#tpu.dimension_semantics<parallel>], iteration_bounds = array<i64: 1>, scalar_prefetch = 0 : i64, scratch_operands = 0 : i64, tpu.core_type = #tpu.core_type<tc>, window_params = [{transform_indices = @transform_0, window_bounds = array<i64: 8, 64>}, {pipeline_mode = #tpu.pipeline_mode<synchronous>, transform_indices = @transform_1, window_bounds = array<i64: 64, 128>}, {pipeline_mode = #tpu.pipeline_mode<synchronous>, transform_indices = @transform_2, window_bounds = array<i64: 1, 128>}, {pipeline_mode = #tpu.pipeline_mode<synchronous>, transform_indices = @transform_3, window_bounds = array<i64: 2, 128, 128>}, {pipeline_mode = #tpu.pipeline_mode<synchronous>, transform_indices = @transform_4, window_bounds = array<i64: 2, 1, 128>}, {pipeline_mode = #tpu.pipeline_mode<synchronous>, transform_indices = @transform_5, window_bounds = array<i64: 128, 128>}, {pipeline_mode = #tpu.pipeline_mode<synchronous>, transform_indices = @transform_6, window_bounds = array<i64: 1, 128>}, {transform_indices = @transform_7, window_bounds = array<i64: 8, 128>}]} {
    %c0 = arith.constant 0 : index
    %c0_0 = arith.constant 0 : index
    %0 = vector.load %arg1[%c0, %c0_0] : memref<8x64xf32, #tpu.memory_space<vmem>>, vector<8x64xf32>
    %1 = arith.truncf %0 : vector<8x64xf32> to vector<8x64xbf16>
    %c0_1 = arith.constant 0 : index
    %c0_2 = arith.constant 0 : index
    %2 = vector.load %arg2[%c0_1, %c0_2] : memref<64x128xbf16, #tpu.memory_space<vmem>>, vector<64x128xbf16>
    %cst = arith.constant dense<0.000000e+00> : vector<8x128xf32>
    %3 = tpu.matmul %1, %2, %cst {dimension_numbers = #tpu.dot_dimension_numbers<[1], [0], [0], [1], [0, 0, 1, 1], [], []>} : vector<8x64xbf16>, vector<64x128xbf16>, vector<8x128xf32> -> vector<8x128xf32>
    %c0_3 = arith.constant 0 : index
    %c0_4 = arith.constant 0 : index
    %4 = vector.load %arg3[%c0_3, %c0_4] : memref<1x128xf32, #tpu.memory_space<vmem>>, vector<1x128xf32>
    %5 = vector.broadcast %4 : vector<1x128xf32> to vector<8x128xf32>
    %6 = arith.addf %3, %5 : vector<8x128xf32>
    %cst_5 = arith.constant 0.000000e+00 : f32
    %7 = vector.broadcast %cst_5 : f32 to vector<8x128xf32>
    %8 = arith.maximumf %6, %7 : vector<8x128xf32>
    %9 = arith.truncf %8 : vector<8x128xf32> to vector<8x128xbf16>
    %c0_6 = arith.constant 0 : index
    %c0_7 = arith.constant 0 : index
    %c0_8 = arith.constant 0 : index
    %10 = vector.load %arg4[%c0_6, %c0_7, %c0_8] : memref<2x128x128xbf16, #tpu.memory_space<vmem>>, vector<1x128x128xbf16>
    %11 = vector.shape_cast %10 : vector<1x128x128xbf16> to vector<128x128xbf16>
    %cst_9 = arith.constant dense<0.000000e+00> : vector<8x128xf32>
    %12 = tpu.matmul %9, %11, %cst_9 {dimension_numbers = #tpu.dot_dimension_numbers<[1], [0], [0], [1], [0, 0, 1, 1], [], []>} : vector<8x128xbf16>, vector<128x128xbf16>, vector<8x128xf32> -> vector<8x128xf32>
    %c0_10 = arith.constant 0 : index
    %c0_11 = arith.constant 0 : index
    %c0_12 = arith.constant 0 : index
    %13 = vector.load %arg5[%c0_10, %c0_11, %c0_12] : memref<2x1x128xf32, #tpu.memory_space<vmem>>, vector<1x1x128xf32>
    %14 = vector.shape_cast %13 : vector<1x1x128xf32> to vector<1x128xf32>
    %15 = vector.broadcast %14 : vector<1x128xf32> to vector<8x128xf32>
    %16 = arith.addf %12, %15 : vector<8x128xf32>
    %cst_13 = arith.constant 0.000000e+00 : f32
    %17 = vector.broadcast %cst_13 : f32 to vector<8x128xf32>
    %18 = arith.maximumf %16, %17 : vector<8x128xf32>
    %19 = arith.truncf %18 : vector<8x128xf32> to vector<8x128xbf16>
    %c1 = arith.constant 1 : index
    %c0_14 = arith.constant 0 : index
    %c0_15 = arith.constant 0 : index
    %20 = vector.load %arg4[%c1, %c0_14, %c0_15] : memref<2x128x128xbf16, #tpu.memory_space<vmem>>, vector<1x128x128xbf16>
    %21 = vector.shape_cast %20 : vector<1x128x128xbf16> to vector<128x128xbf16>
    %cst_16 = arith.constant dense<0.000000e+00> : vector<8x128xf32>
    %22 = tpu.matmul %19, %21, %cst_16 {dimension_numbers = #tpu.dot_dimension_numbers<[1], [0], [0], [1], [0, 0, 1, 1], [], []>} : vector<8x128xbf16>, vector<128x128xbf16>, vector<8x128xf32> -> vector<8x128xf32>
    %c1_17 = arith.constant 1 : index
    %c0_18 = arith.constant 0 : index
    %c0_19 = arith.constant 0 : index
    %23 = vector.load %arg5[%c1_17, %c0_18, %c0_19] : memref<2x1x128xf32, #tpu.memory_space<vmem>>, vector<1x1x128xf32>
    %24 = vector.shape_cast %23 : vector<1x1x128xf32> to vector<1x128xf32>
    %25 = vector.broadcast %24 : vector<1x128xf32> to vector<8x128xf32>
    %26 = arith.addf %22, %25 : vector<8x128xf32>
    %cst_20 = arith.constant 0.000000e+00 : f32
    %27 = vector.broadcast %cst_20 : f32 to vector<8x128xf32>
    %28 = arith.maximumf %26, %27 : vector<8x128xf32>
    %29 = arith.truncf %28 : vector<8x128xf32> to vector<8x128xbf16>
    %c0_21 = arith.constant 0 : index
    %c0_22 = arith.constant 0 : index
    %30 = vector.load %arg6[%c0_21, %c0_22] : memref<128x128xbf16, #tpu.memory_space<vmem>>, vector<128x128xbf16>
    %cst_23 = arith.constant dense<0.000000e+00> : vector<8x128xf32>
    %31 = tpu.matmul %29, %30, %cst_23 {dimension_numbers = #tpu.dot_dimension_numbers<[1], [0], [0], [1], [0, 0, 1, 1], [], []>} : vector<8x128xbf16>, vector<128x128xbf16>, vector<8x128xf32> -> vector<8x128xf32>
    %c0_24 = arith.constant 0 : index
    %c0_25 = arith.constant 0 : index
    %32 = vector.load %arg7[%c0_24, %c0_25] : memref<1x128xf32, #tpu.memory_space<vmem>>, vector<1x128xf32>
    %33 = vector.broadcast %32 : vector<1x128xf32> to vector<8x128xf32>
    %34 = arith.addf %31, %33 : vector<8x128xf32>
    %c0_26 = arith.constant 0 : index
    %c0_27 = arith.constant 0 : index
    %35 = vector.load %arg8[%c0_26, %c0_27] : memref<8x128xf32, #tpu.memory_space<vmem>>, vector<8x128xf32>
    tpu.vector_store %arg8[%c0_26, %c0_27], %34 {strides = array<i32>} : memref<8x128xf32, #tpu.memory_space<vmem>>, vector<8x128xf32>,
    return
  }
  func.func @transform_0(%arg0: i32) -> (i32, i32) {
    %c0_i32 = arith.constant 0 : i32
    %c0_i32_0 = arith.constant 0 : i32
    return %arg0, %c0_i32 : i32, i32
  }
  func.func @transform_1(%arg0: i32) -> (i32, i32) {
    %c0_i32 = arith.constant 0 : i32
    %c0_i32_0 = arith.constant 0 : i32
    %c0_i32_1 = arith.constant 0 : i32
    return %c0_i32, %c0_i32_0 : i32, i32
  }
  func.func @transform_2(%arg0: i32) -> (i32, i32) {
    %c0_i32 = arith.constant 0 : i32
    %c0_i32_0 = arith.constant 0 : i32
    %c0_i32_1 = arith.constant 0 : i32
    return %c0_i32, %c0_i32_0 : i32, i32
  }
  func.func @transform_3(%arg0: i32) -> (i32, i32, i32) {
    %c0_i32 = arith.constant 0 : i32
    %c0_i32_0 = arith.constant 0 : i32
    %c0_i32_1 = arith.constant 0 : i32
    %c0_i32_2 = arith.constant 0 : i32
    return %c0_i32, %c0_i32_0, %c0_i32_1 : i32, i32, i32
  }
  func.func @transform_4(%arg0: i32) -> (i32, i32, i32) {
    %c0_i32 = arith.constant 0 : i32
    %c0_i32_0 = arith.constant 0 : i32
    %c0_i32_1 = arith.constant 0 : i32
    %c0_i32_2 = arith.constant 0 : i32
    return %c0_i32, %c0_i32_0, %c0_i32_1 : i32, i32, i32
  }
  func.func @transform_5(%arg0: i32) -> (i32, i32) {
    %c0_i32 = arith.constant 0 : i32
    %c0_i32_0 = arith.constant 0 : i32
    %c0_i32_1 = arith.constant 0 : i32
    return %c0_i32, %c0_i32_0 : i32, i32
  }
  func.func @transform_6(%arg0: i32) -> (i32, i32) {
    %c0_i32 = arith.constant 0 : i32
    %c0_i32_0 = arith.constant 0 : i32
    %c0_i32_1 = arith.constant 0 : i32
    return %c0_i32, %c0_i32_0 : i32, i32
  }
  func.func @transform_7(%arg0: i32) -> (i32, i32) {
    %c0_i32 = arith.constant 0 : i32
    %c0_i32_0 = arith.constant 0 : i32
    return %arg0, %c0_i32 : i32, i32
  }
}

</mosaic_0001>

<llo_original>
// kernel: net_scores.1
$region0: #{net_scores.1}
  #allocation0 [shape = 'u32[]', space=smem, size = 0x4, offset = 0x4, fixed_abs, tag = 'smem constant byte address 0x4 - core index']
  #allocation1 [shape = 'u32[144,128]{1,0:T(1,128)}', space=vmem, size = 0x12000, scoped, tag = 'internal scratch']
  %s0 = inlined_call_operand.vmem [shape: f32[8,64], index: 0, kind: input, shape index: {}]
  %s1 = inlined_call_operand.vmem [shape: bf16[64,128], index: 1, kind: input, shape index: {}]
  %s2 = inlined_call_operand.vmem [shape: f32[1,128], index: 2, kind: input, shape index: {}]
  %s3 = inlined_call_operand.vmem [shape: bf16[2,128,128], index: 3, kind: input, shape index: {}]
  %s4 = inlined_call_operand.vmem [shape: f32[2,1,128], index: 4, kind: input, shape index: {}]
  %s5 = inlined_call_operand.vmem [shape: bf16[128,128], index: 5, kind: input, shape index: {}]
  %s6 = inlined_call_operand.vmem [shape: f32[1,128], index: 6, kind: input, shape index: {}]
  %s7 = inlined_call_operand.vmem [shape: f32[8,128], index: 7, kind: output, shape index: {}]
  %s8 = sld [smem:[#allocation0]]
  $region38: #{net_scores.1} parent=0
    _
  %s10 = ssub.s32 1, %s8
  %s11 = scalar_select 0, %s10, %s8
  // Predicated region
  $region2: #{net_scores.1} parent=0 // pred_check
    _
  $region3: #{net_scores.1} parent=0 // pred_check_branch
    %13 = sbr.rel (0) target = $region5
  $region4: #{net_scores.1} parent=0 // pred_region
    _
  $region5: #{net_scores.1} parent=0 // pred_fallthru
    _
  // Predicated region
  $region6: #{net_scores.1} parent=0 // pred_check
    _
  $region7: #{net_scores.1} parent=0 // pred_check_branch
    %15 = sbr.rel (0) target = $region9
  $region8: #{net_scores.1} parent=0 // pred_region
    _
  $region9: #{net_scores.1} parent=0 // pred_fallthru
    _
  // Predicated region
  $region10: #{net_scores.1} parent=0 // pred_check
    _
  $region11: #{net_scores.1} parent=0 // pred_check_branch
    %17 = sbr.rel (0) target = $region13
  $region12: #{net_scores.1} parent=0 // pred_region
    _
  $region13: #{net_scores.1} parent=0 // pred_fallthru
    _
  // Predicated region
  $region14: #{net_scores.1} parent=0 // pred_check
    _
  $region15: #{net_scores.1} parent=0 // pred_check_branch
    %19 = sbr.rel (0) target = $region17
  $region16: #{net_scores.1} parent=0 // pred_region
    _
  $region17: #{net_scores.1} parent=0 // pred_fallthru
    _
  // Predicated region
  $region18: #{net_scores.1} parent=0 // pred_check
    _
  $region19: #{net_scores.1} parent=0 // pred_check_branch
    %21 = sbr.rel (0) target = $region21
  $region20: #{net_scores.1} parent=0 // pred_region
    _
  $region21: #{net_scores.1} parent=0 // pred_fallthru
    _
  // Predicated region
  $region22: #{net_scores.1} parent=0 // pred_check
    _
  $region23: #{net_scores.1} parent=0 // pred_check_branch
    %23 = sbr.rel (0) target = $region25
  $region24: #{net_scores.1} parent=0 // pred_region
    _
  $region25: #{net_scores.1} parent=0 // pred_fallthru
    _
  // Predicated region
  $region26: #{net_scores.1} parent=0 // pred_check
    _
  $region27: #{net_scores.1} parent=0 // pred_check_branch
    %25 = sbr.rel (0) target = $region29
  $region28: #{net_scores.1} parent=0 // pred_region
    _
  $region29: #{net_scores.1} parent=0 // pred_fallthru
    _
  %v27 = vld [vmem:[%s0] sm:$0xff]
  %v28 = vpack.c.bf16 %v27, %v27
  %v29 = vld [vmem:[%s1] sm:$0xf]
  %v30 = vld [vmem:[%s1 + $0x4] sm:$0xf]
  %v31 = vld [vmem:[%s1 + $0x8] sm:$0xf]
  %v32 = vld [vmem:[%s1 + $0xc] sm:$0xf]
  %v33 = vld [vmem:[%s1 + $0x10] sm:$0xf]
  %v34 = vld [vmem:[%s1 + $0x14] sm:$0xf]
  %v35 = vld [vmem:[%s1 + $0x18] sm:$0xf]
  %v36 = vld [vmem:[%s1 + $0x1c] sm:$0xf]
  %v37 = vld [vmem:[%s2] sm:$0x1]
  %v39 = vlaneseq
  %v40 = vshrl.u32 %v39, 7
  %v41 = vsub.s32 0, %v40
  %v42 = vrot.slane %v37, %v41
  %v52 = vunpack.c.l.b16 %v29
  %v53 = vunpack.c.l.b16 %v30
  %v54 = vunpack.c.l.b16 %v31
  %v55 = vunpack.c.l.b16 %v32
  %v56 = vunpack.c.l.b16 %v33
  %v57 = vunpack.c.l.b16 %v34
  %v58 = vunpack.c.l.b16 %v35
  %v59 = vunpack.c.l.b16 %v36
  %v60 = vpack.c.b16 %v53, %v52
  %v61 = vpack.c.b16 %v55, %v54
  %v62 = vpack.c.b16 %v57, %v56
  %v63 = vpack.c.b16 %v59, %v58
  %vm68 = vcmask 523264
  %v70 = vsel %vm68, %v28, 0
  %72 = vmatprep.subr.bf16.mxu0 0
  %73 = vmatpush1.bf16.msra.mxu0 %v60
  %74 = vmatprep.subr.bf16.mxu0 0
  %75 = vmatpush1.bf16.msra.mxu0 %v61
  %76 = vmatprep.subr.bf16.mxu0 0
  %77 = vmatpush1.bf16.msra.mxu0 %v62
  %78 = vmatprep.subr.bf16.mxu0 0
  %79 = vmatpush1.bf16.msra.mxu0 %v63
  %80 = vmatprep.subr.bf16.mxu0 0
  %81 = vmatpush1.bf16.msra.mxu0 0
  %82 = vmatprep.subr.bf16.mxu0 0
  %83 = vmatpush1.bf16.msra.mxu0 0
  %84 = vmatprep.subr.bf16.mxu0 0
  %85 = vmatpush1.bf16.msra.mxu0 0
  %86 = vmatprep.subr.bf16.mxu0 0
  %87 = vmatpush1.bf16.msra.mxu0 0
  %88 = vmatprep.subr.bf16.mxu0 0
  %89 = vmatpush1.bf16.msra.mxu0 0
  %90 = vmatprep.subr.bf16.mxu0 0
  %91 = vmatpush1.bf16.msra.mxu0 0
  %92 = vmatprep.subr.bf16.mxu0 0
  %93 = vmatpush1.bf16.msra.mxu0 0
  %94 = vmatprep.subr.bf16.mxu0 0
  %95 = vmatpush1.bf16.msra.mxu0 0
  %96 = vmatprep.subr.bf16.mxu0 0
  %97 = vmatpush1.bf16.msra.mxu0 0
  %98 = vmatprep.subr.bf16.mxu0 0
  %99 = vmatpush1.bf16.msra.mxu0 0
  %100 = vmatprep.subr.bf16.mxu0 0
  %101 = vmatpush1.bf16.msra.mxu0 0
  %102 = vmatprep.subr.bf16.mxu0 0
  %103 = vmatpush1.bf16.msra.mxu0 0
  %104 = vmatprep.mubr.bf16.mxu0 0
  %105 = vmatmul.mubr.bf16.gmra.mrb[0].mxu0 %v70
  %v106 = vpop.f32.mrb[0].mxu0
  %v107 = vadd.f32 %v42, %v106
  %v108 = vpop.f32.mrb[0].mxu0
  %v109 = vpop.f32.mrb[0].mxu0
  %v110 = vpop.f32.mrb[0].mxu0
  %111 = vdwg.mxu0
  %v112 = vmax.f32 %v107, 0.0
  %v113 = vpack.c.bf16 %v112, %v112
  %v114 = vld [vmem:[%s3] sm:$0xf]
  %v115 = vld [vmem:[%s3 + $0x4] sm:$0xf]
  %v116 = vld [vmem:[%s3 + $0x8] sm:$0xf]
  %v117 = vld [vmem:[%s3 + $0xc] sm:$0xf]
  %v118 = vld [vmem:[%s3 + $0x10] sm:$0xf]
  %v119 = vld [vmem:[%s3 + $0x14] sm:$0xf]
  %v120 = vld [vmem:[%s3 + $0x18] sm:$0xf]
  %v121 = vld [vmem:[%s3 + $0x1c] sm:$0xf]
  %v122 = vld [vmem:[%s3 + $0x20] sm:$0xf]
  %v123 = vld [vmem:[%s3 + $0x24] sm:$0xf]
  %v124 = vld [vmem:[%s3 + $0x28] sm:$0xf]
  %v125 = vld [vmem:[%s3 + $0x2c] sm:$0xf]
  %v126 = vld [vmem:[%s3 + $0x30] sm:$0xf]
  %v127 = vld [vmem:[%s3 + $0x34] sm:$0xf]
  %v128 = vld [vmem:[%s3 + $0x38] sm:$0xf]
  %v129 = vld [vmem:[%s3 + $0x3c] sm:$0xf]
  %v130 = vld [vmem:[%s4] sm:$0x1]
  %v132 = vlaneseq
  %v133 = vshrl.u32 %v132, 7
  %v134 = vsub.s32 0, %v133
  %v135 = vrot.slane %v130, %v134
  %v153 = vunpack.c.l.b16 %v114
  %v154 = vunpack.c.l.b16 %v115
  %v155 = vunpack.c.l.b16 %v116
  %v156 = vunpack.c.l.b16 %v117
  %v157 = vunpack.c.l.b16 %v118
  %v158 = vunpack.c.l.b16 %v119
  %v159 = vunpack.c.l.b16 %v120
  %v160 = vunpack.c.l.b16 %v121
  %v161 = vunpack.c.l.b16 %v122
  %v162 = vunpack.c.l.b16 %v123
  %v163 = vunpack.c.l.b16 %v124
  %v164 = vunpack.c.l.b16 %v125
  %v165 = vunpack.c.l.b16 %v126
  %v166 = vunpack.c.l.b16 %v127
  %v167 = vunpack.c.l.b16 %v128
  %v168 = vunpack.c.l.b16 %v129
  %v169 = vpack.c.b16 %v154, %v153
  %v170 = vpack.c.b16 %v156, %v155
  %v171 = vpack.c.b16 %v158, %v157
  %v172 = vpack.c.b16 %v160, %v159
  %v173 = vpack.c.b16 %v162, %v161
  %v174 = vpack.c.b16 %v164, %v163
  %v175 = vpack.c.b16 %v166, %v165
  %v176 = vpack.c.b16 %v168, %v167
  %185 = vmatprep.subr.bf16.mxu0 0
  %186 = vmatpush1.bf16.msra.mxu0 %v169
  %187 = vmatprep.subr.bf16.mxu0 0
  %188 = vmatpush1.bf16.msra.mxu0 %v170
  %189 = vmatprep.subr.bf16.mxu0 0
  %190 = vmatpush1.bf16.msra.mxu0 %v171
  %191 = vmatprep.subr.bf16.mxu0 0
  %192 = vmatpush1.bf16.msra.mxu0 %v172
  %193 = vmatprep.subr.bf16.mxu0 0
  %194 = vmatpush1.bf16.msra.mxu0 %v173
  %195 = vmatprep.subr.bf16.mxu0 0
  %196 = vmatpush1.bf16.msra.mxu0 %v174
  %197 = vmatprep.subr.bf16.mxu0 0
  %198 = vmatpush1.bf16.msra.mxu0 %v175
  %199 = vmatprep.subr.bf16.mxu0 0
  %200 = vmatpush1.bf16.msra.mxu0 %v176
  %201 = vmatprep.subr.bf16.mxu0 0
  %202 = vmatpush1.bf16.msra.mxu0 0
  %203 = vmatprep.subr.bf16.mxu0 0
  %204 = vmatpush1.bf16.msra.mxu0 0
  %205 = vmatprep.subr.bf16.mxu0 0
  %206 = vmatpush1.bf16.msra.mxu0 0
  %207 = vmatprep.subr.bf16.mxu0 0
  %208 = vmatpush1.bf16.msra.mxu0 0
  %209 = vmatprep.subr.bf16.mxu0 0
  %210 = vmatpush1.bf16.msra.mxu0 0
  %211 = vmatprep.subr.bf16.mxu0 0
  %212 = vmatpush1.bf16.msra.mxu0 0
  %213 = vmatprep.subr.bf16.mxu0 0
  %214 = vmatpush1.bf16.msra.mxu0 0
  %215 = vmatprep.subr.bf16.mxu0 0
  %216 = vmatpush1.bf16.msra.mxu0 0
  %217 = vmatprep.mubr.bf16.mxu0 0
  %218 = vmatmul.mubr.bf16.gmra.mrb[0].mxu0 %v113
  %v219 = vpop.f32.mrb[0].mxu0
  %v220 = vadd.f32 %v135, %v219
  %v221 = vpop.f32.mrb[0].mxu0
  %v222 = vpop.f32.mrb[0].mxu0
  %v223 = vpop.f32.mrb[0].mxu0
  %224 = vdwg.mxu0
  %v225 = vmax.f32 %v220, 0.0
  %v226 = vpack.c.bf16 %v225, %v225
  %s227 = scalar_lea.vmem %s3, 64
  %v228 = vld [vmem:[%s227] sm:$0xf]
  %v229 = vld [vmem:[%s227 + $0x4] sm:$0xf]
  %v230 = vld [vmem:[%s227 + $0x8] sm:$0xf]
  %v231 = vld [vmem:[%s227 + $0xc] sm:$0xf]
  %v232 = vld [vmem:[%s227 + $0x10] sm:$0xf]
  %v233 = vld [vmem:[%s227 + $0x14] sm:$0xf]
  %v234 = vld [vmem:[%s227 + $0x18] sm:$0xf]
  %v235 = vld [vmem:[%s227 + $0x1c] sm:$0xf]
  %v236 = vld [vmem:[%s227 + $0x20] sm:$0xf]
  %v237 = vld [vmem:[%s227 + $0x24] sm:$0xf]
  %v238 = vld [vmem:[%s227 + $0x28] sm:$0xf]
  %v239 = vld [vmem:[%s227 + $0x2c] sm:$0xf]
  %v240 = vld [vmem:[%s227 + $0x30] sm:$0xf]
  %v241 = vld [vmem:[%s227 + $0x34] sm:$0xf]
  %v242 = vld [vmem:[%s227 + $0x38] sm:$0xf]
  %v243 = vld [vmem:[%s227 + $0x3c] sm:$0xf]
  %s244 = scalar_lea.vmem %s4, 1
  %v245 = vld [vmem:[%s244] sm:$0x1]
  %v247 = vlaneseq
  %v248 = vshrl.u32 %v247, 7
  %v249 = vsub.s32 0, %v248
  %v250 = vrot.slane %v245, %v249
  %v268 = vunpack.c.l.b16 %v228
  %v269 = vunpack.c.l.b16 %v229
  %v270 = vunpack.c.l.b16 %v230
  %v271 = vunpack.c.l.b16 %v231
  %v272 = vunpack.c.l.b16 %v232
  %v273 = vunpack.c.l.b16 %v233
  %v274 = vunpack.c.l.b16 %v234
  %v275 = vunpack.c.l.b16 %v235
  %v276 = vunpack.c.l.b16 %v236
  %v277 = vunpack.c.l.b16 %v237
  %v278 = vunpack.c.l.b16 %v238
  %v279 = vunpack.c.l.b16 %v239
  %v280 = vunpack.c.l.b16 %v240
  %v281 = vunpack.c.l.b16 %v241
  %v282 = vunpack.c.l.b16 %v242
  %v283 = vunpack.c.l.b16 %v243
  %v284 = vpack.c.b16 %v269, %v268
  %v285 = vpack.c.b16 %v271, %v270
  %v286 = vpack.c.b16 %v273, %v272
  %v287 = vpack.c.b16 %v275, %v274
  %v288 = vpack.c.b16 %v277, %v276
  %v289 = vpack.c.b16 %v279, %v278
  %v290 = vpack.c.b16 %v281, %v280
  %v291 = vpack.c.b16 %v283, %v282
  %300 = vmatprep.subr.bf16.mxu0 0
  %301 = vmatpush1.bf16.msra.mxu0 %v284
  %302 = vmatprep.subr.bf16.mxu0 0
  %303 = vmatpush1.bf16.msra.mxu0 %v285
  %304 = vmatprep.subr.bf16.mxu0 0
  %305 = vmatpush1.bf16.msra.mxu0 %v286
  %306 = vmatprep.subr.bf16.mxu0 0
  %307 = vmatpush1.bf16.msra.mxu0 %v287
  %308 = vmatprep.subr.bf16.mxu0 0
  %309 = vmatpush1.bf16.msra.mxu0 %v288
  %310 = vmatprep.subr.bf16.mxu0 0
  %311 = vmatpush1.bf16.msra.mxu0 %v289
  %312 = vmatprep.subr.bf16.mxu0 0
  %313 = vmatpush1.bf16.msra.mxu0 %v290
  %314 = vmatprep.subr.bf16.mxu0 0
  %315 = vmatpush1.bf16.msra.mxu0 %v291
  %316 = vmatprep.subr.bf16.mxu0 0
  %317 = vmatpush1.bf16.msra.mxu0 0
  %318 = vmatprep.subr.bf16.mxu0 0
  %319 = vmatpush1.bf16.msra.mxu0 0
  %320 = vmatprep.subr.bf16.mxu0 0
  %321 = vmatpush1.bf16.msra.mxu0 0
  %322 = vmatprep.subr.bf16.mxu0 0
  %323 = vmatpush1.bf16.msra.mxu0 0
  %324 = vmatprep.subr.bf16.mxu0 0
  %325 = vmatpush1.bf16.msra.mxu0 0
  %326 = vmatprep.subr.bf16.mxu0 0
  %327 = vmatpush1.bf16.msra.mxu0 0
  %328 = vmatprep.subr.bf16.mxu0 0
  %329 = vmatpush1.bf16.msra.mxu0 0
  %330 = vmatprep.subr.bf16.mxu0 0
  %331 = vmatpush1.bf16.msra.mxu0 0
  %332 = vmatprep.mubr.bf16.mxu0 0
  %333 = vmatmul.mubr.bf16.gmra.mrb[0].mxu0 %v226
  %v334 = vpop.f32.mrb[0].mxu0
  %v335 = vadd.f32 %v250, %v334
  %v336 = vpop.f32.mrb[0].mxu0
  %v337 = vpop.f32.mrb[0].mxu0
  %v338 = vpop.f32.mrb[0].mxu0
  %339 = vdwg.mxu0
  %v340 = vmax.f32 %v335, 0.0
  %v341 = vpack.c.bf16 %v340, %v340
  %v342 = vld [vmem:[%s5] sm:$0xf]
  %v343 = vld [vmem:[%s5 + $0x4] sm:$0xf]
  %v344 = vld [vmem:[%s5 + $0x8] sm:$0xf]
  %v345 = vld [vmem:[%s5 + $0xc] sm:$0xf]
  %v346 = vld [vmem:[%s5 + $0x10] sm:$0xf]
  %v347 = vld [vmem:[%s5 + $0x14] sm:$0xf]
  %v348 = vld [vmem:[%s5 + $0x18] sm:$0xf]
  %v349 = vld [vmem:[%s5 + $0x1c] sm:$0xf]
  %v350 = vld [vmem:[%s5 + $0x20] sm:$0xf]
  %v351 = vld [vmem:[%s5 + $0x24] sm:$0xf]
  %v352 = vld [vmem:[%s5 + $0x28] sm:$0xf]
  %v353 = vld [vmem:[%s5 + $0x2c] sm:$0xf]
  %v354 = vld [vmem:[%s5 + $0x30] sm:$0xf]
  %v355 = vld [vmem:[%s5 + $0x34] sm:$0xf]
  %v356 = vld [vmem:[%s5 + $0x38] sm:$0xf]
  %v357 = vld [vmem:[%s5 + $0x3c] sm:$0xf]
  %v358 = vld [vmem:[%s6] sm:$0x1]
  %v360 = vlaneseq
  %v361 = vshrl.u32 %v360, 7
  %v362 = vsub.s32 0, %v361
  %v363 = vrot.slane %v358, %v362
  %v381 = vunpack.c.l.b16 %v342
  %v382 = vunpack.c.l.b16 %v343
  %v383 = vunpack.c.l.b16 %v344
  %v384 = vunpack.c.l.b16 %v345
  %v385 = vunpack.c.l.b16 %v346
  %v386 = vunpack.c.l.b16 %v347
  %v387 = vunpack.c.l.b16 %v348
  %v388 = vunpack.c.l.b16 %v349
  %v389 = vunpack.c.l.b16 %v350
  %v390 = vunpack.c.l.b16 %v351
  %v391 = vunpack.c.l.b16 %v352
  %v392 = vunpack.c.l.b16 %v353
  %v393 = vunpack.c.l.b16 %v354
  %v394 = vunpack.c.l.b16 %v355
  %v395 = vunpack.c.l.b16 %v356
  %v396 = vunpack.c.l.b16 %v357
  %v397 = vpack.c.b16 %v382, %v381
  %v398 = vpack.c.b16 %v384, %v383
  %v399 = vpack.c.b16 %v386, %v385
  %v400 = vpack.c.b16 %v388, %v387
  %v401 = vpack.c.b16 %v390, %v389
  %v402 = vpack.c.b16 %v392, %v391
  %v403 = vpack.c.b16 %v394, %v393
  %v404 = vpack.c.b16 %v396, %v395
  %413 = vmatprep.subr.bf16.mxu0 0
  %414 = vmatpush1.bf16.msra.mxu0 %v397
  %415 = vmatprep.subr.bf16.mxu0 0
  %416 = vmatpush1.bf16.msra.mxu0 %v398
  %417 = vmatprep.subr.bf16.mxu0 0
  %418 = vmatpush1.bf16.msra.mxu0 %v399
  %419 = vmatprep.subr.bf16.mxu0 0
  %420 = vmatpush1.bf16.msra.mxu0 %v400
  %421 = vmatprep.subr.bf16.mxu0 0
  %422 = vmatpush1.bf16.msra.mxu0 %v401
  %423 = vmatprep.subr.bf16.mxu0 0
  %424 = vmatpush1.bf16.msra.mxu0 %v402
  %425 = vmatprep.subr.bf16.mxu0 0
  %426 = vmatpush1.bf16.msra.mxu0 %v403
  %427 = vmatprep.subr.bf16.mxu0 0
  %428 = vmatpush1.bf16.msra.mxu0 %v404
  %429 = vmatprep.subr.bf16.mxu0 0
  %430 = vmatpush1.bf16.msra.mxu0 0
  %431 = vmatprep.subr.bf16.mxu0 0
  %432 = vmatpush1.bf16.msra.mxu0 0
  %433 = vmatprep.subr.bf16.mxu0 0
  %434 = vmatpush1.bf16.msra.mxu0 0
  %435 = vmatprep.subr.bf16.mxu0 0
  %436 = vmatpush1.bf16.msra.mxu0 0
  %437 = vmatprep.subr.bf16.mxu0 0
  %438 = vmatpush1.bf16.msra.mxu0 0
  %439 = vmatprep.subr.bf16.mxu0 0
  %440 = vmatpush1.bf16.msra.mxu0 0
  %441 = vmatprep.subr.bf16.mxu0 0
  %442 = vmatpush1.bf16.msra.mxu0 0
  %443 = vmatprep.subr.bf16.mxu0 0
  %444 = vmatpush1.bf16.msra.mxu0 0
  %445 = vmatprep.mubr.bf16.mxu0 0
  %446 = vmatmul.mubr.bf16.gmra.mrb[0].mxu0 %v341
  %v447 = vpop.f32.mrb[0].mxu0
  %v448 = vadd.f32 %v363, %v447
  %v449 = vpop.f32.mrb[0].mxu0
  %v450 = vpop.f32.mrb[0].mxu0
  %v451 = vpop.f32.mrb[0].mxu0
  %452 = vdwg.mxu0
  %453 = vst [vmem:[%s7] sm:$0xff] %v448
  // Predicated region
  $region30: #{net_scores.1} parent=0 // pred_check
    _
  $region31: #{net_scores.1} parent=0 // pred_check_branch
    %455 = sbr.rel (0) target = $region33
  $region32: #{net_scores.1} parent=0 // pred_region
    _
  $region33: #{net_scores.1} parent=0 // pred_fallthru
    _
  // Predicated region
  $region34: #{net_scores.1} parent=0 // pred_check
    _
  $region35: #{net_scores.1} parent=0 // pred_check_branch
    %457 = sbr.rel (0) target = $region37
  $region36: #{net_scores.1} parent=0 // pred_region
    _
  $region37: #{net_scores.1} parent=0 // pred_fallthru
    _

</llo_original>
